<compile_context>
chip_gen: v6e
topology: v6e:2x2x1
jax: 0.10.0
libtpu: 0.0.40
codegen_flags: <defaults>
</compile_context>

<pallas_src>
import functools

import jax
import jax.numpy as jnp
from jax.experimental import pallas as pl
from jax.experimental.pallas import tpu as pltpu


# --------------------------------------------------------------------------
# small utilities
# --------------------------------------------------------------------------
def _compiler_params(**kw):
    cp = getattr(pltpu, "CompilerParams", None)
    if cp is None:                       # older JAX fallback
        cp = getattr(pltpu, "TPUCompilerParams")
    return cp(**kw)


def _vmem_limit_bytes():
    """Per-generation scoped VMEM limit (3/4 of physical, capped at 96 MiB)."""
    phys = 64 * 1024 * 1024              # conservative default (v7x per-core)
    try:
        info = pltpu.get_tpu_info()
        phys = int(getattr(info, "vmem_capacity_bytes", phys))
    except Exception:
        pass
    return int(min(96 * 1024 * 1024, (phys * 3) // 4))


def _pick_tiles(rows, S, dsize, vmem_limit, max_lane_tile=None):
    """Row / lane block sizes for the two-pass fallback (>= ~MiB per block)."""
    row_blk = rows if rows <= 256 else 256          # 256 is a multiple of 8
    per_block_budget = min(4 * 1024 * 1024, vmem_limit // 8)
    lanes = per_block_budget // max(1, row_blk * dsize)
    if max_lane_tile is not None:
        lanes = min(lanes, max_lane_tile)
    if lanes >= S:
        return row_blk, S                           # one full-extent lane block
    tile_s = max(128, (lanes // 128) * 128)
    tile_s = min(tile_s, 8192)
    return row_blk, tile_s


# --------------------------------------------------------------------------
# fused single-read kernel: pool + gate MLP + rescale, one batch item / step
# --------------------------------------------------------------------------
def _fused_kernel(xl_ref, xg_ref, w1l_ref, w1g_ref, b1_ref,
                  w2l_ref, b2l_ref, w2g_ref, b2g_ref,
                  ol_ref, og_ref, *, inv_s):
    # Global average pool (f32 accumulation) over the flattened spatial axis.
    pool_l = jnp.sum(xl_ref[...], axis=-1, keepdims=True,
                     dtype=jnp.float32) * inv_s                 # (in_cl, 1)
    pool_g = jnp.sum(xg_ref[...], axis=-1, keepdims=True,
                     dtype=jnp.float32) * inv_s                 # (in_cg, 1)

    # conv1 (1x1x1) + ReLU — tiny MLP, negligible vs. the DMA of the slab.
    y = (jnp.dot(w1l_ref[...], pool_l, preferred_element_type=jnp.float32)
         + jnp.dot(w1g_ref[...], pool_g, preferred_element_type=jnp.float32)
         + b1_ref[...])
    y = jnp.maximum(y, 0.0)                                     # (hidden, 1)

    gl = jax.nn.sigmoid(
        jnp.dot(w2l_ref[...], y, preferred_element_type=jnp.float32)
        + b2l_ref[...])                                         # (in_cl, 1)
    gg = jax.nn.sigmoid(
        jnp.dot(w2g_ref[...], y, preferred_element_type=jnp.float32)
        + b2g_ref[...])                                         # (in_cg, 1)

    # Excitation rescale in the input dtype (slab already resident in VMEM).
    ol_ref[...] = xl_ref[...] * gl.astype(ol_ref.dtype)
    og_ref[...] = xg_ref[...] * gg.astype(og_ref.dtype)


def _ffcse_fused(x_l, x_g, params, vmem_limit):
    N, in_cl, D, H, W = x_l.shape
    in_cg = x_g.shape[1]
    S = D * H * W
    w1, b1, w2l, b2l, w2g, b2g = params
    hidden = w1.shape[0]
    w1l, w1g = w1[:, :in_cl], w1[:, in_cl:]

    xl2 = x_l.reshape(N, in_cl, S)
    xg2 = x_g.reshape(N, in_cg, S)

    # TODO(synk): on v7x with N == 1 this single-step grid uses one TensorCore;
    # a lane-split partial-pool variant would engage both cores.
    out_l, out_g = pl.pallas_call(
        functools.partial(_fused_kernel, inv_s=1.0 / S),
        out_shape=(jax.ShapeDtypeStruct((N, in_cl, S), x_l.dtype),
                   jax.ShapeDtypeStruct((N, in_cg, S), x_g.dtype)),
        grid=(N,),
        in_specs=[
            pl.BlockSpec((None, in_cl, S), lambda n: (n, 0, 0)),
            pl.BlockSpec((None, in_cg, S), lambda n: (n, 0, 0)),
            pl.BlockSpec((hidden, in_cl), lambda n: (0, 0)),
            pl.BlockSpec((hidden, in_cg), lambda n: (0, 0)),
            pl.BlockSpec((hidden, 1), lambda n: (0, 0)),
            pl.BlockSpec((in_cl, hidden), lambda n: (0, 0)),
            pl.BlockSpec((in_cl, 1), lambda n: (0, 0)),
            pl.BlockSpec((in_cg, hidden), lambda n: (0, 0)),
            pl.BlockSpec((in_cg, 1), lambda n: (0, 0)),
        ],
        out_specs=(
            pl.BlockSpec((None, in_cl, S), lambda n: (n, 0, 0)),
            pl.BlockSpec((None, in_cg, S), lambda n: (n, 0, 0)),
        ),
        compiler_params=_compiler_params(
            dimension_semantics=("parallel",),
            vmem_limit_bytes=vmem_limit),
    )(xl2, xg2, w1l, w1g, b1, w2l, b2l, w2g, b2g)

    return out_l.reshape(x_l.shape), out_g.reshape(x_g.shape)


# --------------------------------------------------------------------------
# two-pass fallback: tiled row-sum (masked ragged tail) + tiled row-rescale
# --------------------------------------------------------------------------
def _rowsum_kernel(x_ref, s_ref, *, S, tile_s):
    k = pl.program_id(1)

    @pl.when(k == 0)
    def _():
        s_ref[...] = jnp.zeros_like(s_ref)

    # Lane-mask the ragged tail so no out-of-kernel padding is needed.
    lane = jax.lax.broadcasted_iota(jnp.int32, x_ref.shape, 1) + k * tile_s
    x = jnp.where(lane < S, x_ref[...], jnp.zeros((), x_ref.dtype))
    s_ref[...] += jnp.sum(x, axis=-1, keepdims=True, dtype=jnp.float32)


def _rowscale_kernel(x_ref, g_ref, o_ref):
    # (ROW_BLK, TILE_S) * (ROW_BLK, 1); out-of-bounds tail writes are clipped
    # automatically on the boundary block, so no pad / slice is required.
    o_ref[...] = x_ref[...] * g_ref[...]


def _row_pool_sums(x2d, *, row_blk, tile_s, vmem_limit):
    R, S = x2d.shape
    return pl.pallas_call(
        functools.partial(_rowsum_kernel, S=S, tile_s=tile_s),
        out_shape=jax.ShapeDtypeStruct((R, 1), jnp.float32),
        grid=(pl.cdiv(R, row_blk), pl.cdiv(S, tile_s)),
        in_specs=[pl.BlockSpec((row_blk, tile_s), lambda r, k: (r, k))],
        out_specs=pl.BlockSpec((row_blk, 1), lambda r, k: (r, 0)),
        compiler_params=_compiler_params(
            dimension_semantics=("parallel", "arbitrary"),
            vmem_limit_bytes=vmem_limit),
    )(x2d)


def _row_scale(x2d, gates, *, row_blk, tile_s, vmem_limit):
    R, S = x2d.shape
    return pl.pallas_call(
        _rowscale_kernel,
        out_shape=jax.ShapeDtypeStruct((R, S), x2d.dtype),
        grid=(pl.cdiv(R, row_blk), pl.cdiv(S, tile_s)),
        in_specs=[pl.BlockSpec((row_blk, tile_s), lambda r, k: (r, k)),
                  pl.BlockSpec((row_blk, 1), lambda r, k: (r, 0))],
        out_specs=pl.BlockSpec((row_blk, tile_s), lambda r, k: (r, k)),
        compiler_params=_compiler_params(
            dimension_semantics=("parallel", "parallel"),
            vmem_limit_bytes=vmem_limit),
    )(x2d, gates)


def _ffcse_two_pass(x_l, x_g, params, vmem_limit, max_lane_tile):
    N, in_cl, D, H, W = x_l.shape
    in_cg = x_g.shape[1]
    S = D * H * W
    w1, b1, w2l, b2l, w2g, b2g = params
    dsize = jnp.dtype(x_l.dtype).itemsize

    # Flatten batch into the sublane axis (free: rows are contiguous) so each
    # grid step moves a large, lane-dense block.
    xl2 = x_l.reshape(N * in_cl, S)
    xg2 = x_g.reshape(N * in_cg, S)
    rb_l, ts_l = _pick_tiles(N * in_cl, S, dsize, vmem_limit, max_lane_tile)
    rb_g, ts_g = _pick_tiles(N * in_cg, S, dsize, vmem_limit, max_lane_tile)

    # Pass 1: tiled global-average-pool sums (f32, ragged tail lane-masked).
    sums_l = _row_pool_sums(xl2, row_blk=rb_l, tile_s=ts_l, vmem_limit=vmem_limit)
    sums_g = _row_pool_sums(xg2, row_blk=rb_g, tile_s=ts_g, vmem_limit=vmem_limit)

    # Gate MLP (tiny, O(N*C*hidden)) in plain JAX.
    inv_s = jnp.float32(1.0 / S)
    pooled = jnp.concatenate([sums_l.reshape(N, in_cl),
                              sums_g.reshape(N, in_cg)], axis=1) * inv_s
    y = jnp.maximum(pooled @ w1.T + b1[:, 0], 0.0)
    gl = jax.nn.sigmoid(y @ w2l.T + b2l[:, 0]).astype(x_l.dtype)
    gg = jax.nn.sigmoid(y @ w2g.T + b2g[:, 0]).astype(x_g.dtype)

    # Pass 2: tiled per-row rescale in the input dtype (no pad, no slice).
    out_l = _row_scale(xl2, gl.reshape(N * in_cl, 1),
                       row_blk=rb_l, tile_s=ts_l, vmem_limit=vmem_limit)
    out_g = _row_scale(xg2, gg.reshape(N * in_cg, 1),
                       row_blk=rb_g, tile_s=ts_g, vmem_limit=vmem_limit)
    return out_l.reshape(x_l.shape), out_g.reshape(x_g.shape)


# --------------------------------------------------------------------------
# public entry point
# --------------------------------------------------------------------------
def ffcse_block(x_l, x_g, params, *, force_two_pass=False, max_lane_tile=None):
    """x_l: (N, in_cl, D, H, W), x_g: (N, in_cg, D, H, W)."""
    # TODO(synk): ratio_g == 0 or == 1 (conv_a2l / conv_a2g is None in the
    # PyTorch module) would need a single-branch kernel variant; not done here.
    N, in_cl, D, H, W = x_l.shape
    in_cg = x_g.shape[1]
    S = D * H * W
    dsize = jnp.dtype(x_l.dtype).itemsize
    vmem_limit = _vmem_limit_bytes()

    slab_bytes = (in_cl + in_cg) * S * dsize
    weight_bytes = sum(int(w.size) * 4 for w in params)
    # Fused path keeps the per-item in + out slabs double-buffered.
    fused_fits = 4 * slab_bytes + 2 * weight_bytes + (4 << 20) <= vmem_limit

    if fused_fits and not force_two_pass:
        return _ffcse_fused(x_l, x_g, params, vmem_limit)
    return _ffcse_two_pass(x_l, x_g, params, vmem_limit, max_lane_tile)


# --------------------------------------------------------------------------
# pure-JAX reference and parameter construction
# --------------------------------------------------------------------------
def ffcse_ref(x_l, x_g, params):
    w1, b1, w2l, b2l, w2g, b2g = params
    x = jnp.concatenate([x_l, x_g], axis=1)
    pooled = jnp.mean(x, axis=(2, 3, 4))                       # (N, C)
    y = jnp.maximum(pooled @ w1.T + b1[:, 0], 0.0)             # (N, hidden)
    gl = jax.nn.sigmoid(y @ w2l.T + b2l[:, 0])                 # (N, in_cl)
    gg = jax.nn.sigmoid(y @ w2g.T + b2g[:, 0])                 # (N, in_cg)
    out_l = x_l * gl[:, :, None, None, None]
    out_g = x_g * gg[:, :, None, None, None]
    return out_l, out_g


def make_params(key, channels, ratio_g, r=16):
    in_cg = int(channels * ratio_g)
    in_cl = channels - in_cg
    hidden = channels // r
    assert in_cl > 0 and in_cg > 0 and hidden > 0
    ks = jax.random.split(key, 6)
    w1 = 0.1 * jax.random.normal(ks[0], (hidden, channels), jnp.float32)
    b1 = 0.1 * jax.random.normal(ks[1], (hidden, 1), jnp.float32)
    w2l = 0.1 * jax.random.normal(ks[2], (in_cl, hidden), jnp.float32)
    b2l = 0.1 * jax.random.normal(ks[3], (in_cl, 1), jnp.float32)
    w2g = 0.1 * jax.random.normal(ks[4], (in_cg, hidden), jnp.float32)
    b2g = 0.1 * jax.random.normal(ks[5], (in_cg, 1), jnp.float32)
    return (w1, b1, w2l, b2l, w2g, b2g), in_cl, in_cg


if __name__ == "__main__":
    key = jax.random.PRNGKey(0)
    channels, ratio_g = 32, 0.5
    kp, k1, k2, k3, k4 = jax.random.split(key, 5)
    params, in_cl, in_cg = make_params(kp, channels, ratio_g)

    # ---- test 1: fused single-read path (S multiple of 128) --------------
    N, D, H, W = 2, 8, 8, 16                       # S = 1024
    x_l = jax.random.normal(k1, (N, in_cl, D, H, W), jnp.float32)
    x_g = jax.random.normal(k2, (N, in_cg, D, H, W), jnp.float32)
    out_l, out_g = jax.block_until_ready(ffcse_block(x_l, x_g, params))
    ref_l, ref_g = ffcse_ref(x_l, x_g, params)
    assert jnp.allclose(out_l, ref_l, atol=2e-5, rtol=2e-5)
    assert jnp.allclose(out_g, ref_g, atol=2e-5, rtol=2e-5)

    # ---- test 2: two-pass fallback with a ragged spatial tail ------------
    N, D, H, W = 2, 5, 7, 9                        # S = 315 (ragged tail)
    x_l = jax.random.normal(k3, (N, in_cl, D, H, W), jnp.float32)
    x_g = jax.random.normal(k4, (N, in_cg, D, H, W), jnp.float32)
    out_l, out_g = jax.block_until_ready(
        ffcse_block(x_l, x_g, params, force_two_pass=True, max_lane_tile=128))
    ref_l, ref_g = ffcse_ref(x_l, x_g, params)
    assert jnp.allclose(out_l, ref_l, atol=2e-5, rtol=2e-5)
    assert jnp.allclose(out_g, ref_g, atol=2e-5, rtol=2e-5)

    print("KERNEL_OK")
</pallas_src>

<mosaic_0001>
module attributes {stable_mosaic.version = 11 : i64} {
  func.func @_fused_kernel(%arg0: i32, %arg1: memref<1x16x1024xf32, #tpu.memory_space<vmem>>, %arg2: memref<1x16x1024xf32, #tpu.memory_space<vmem>>, %arg3: memref<2x16xf32, #tpu.memory_space<vmem>>, %arg4: memref<2x16xf32, #tpu.memory_space<vmem>>, %arg5: memref<2x1xf32, #tpu.memory_space<vmem>>, %arg6: memref<16x2xf32, #tpu.memory_space<vmem>>, %arg7: memref<16x1xf32, #tpu.memory_space<vmem>>, %arg8: memref<16x2xf32, #tpu.memory_space<vmem>>, %arg9: memref<16x1xf32, #tpu.memory_space<vmem>>, %arg10: memref<1x16x1024xf32, #tpu.memory_space<vmem>>, %arg11: memref<1x16x1024xf32, #tpu.memory_space<vmem>>) attributes {dimension_semantics = [#tpu.dimension_semantics<parallel>], iteration_bounds = array<i64: 2>, scalar_prefetch = 0 : i64, scratch_operands = 0 : i64, tpu.core_type = #tpu.core_type<tc>, window_params = [{transform_indices = @transform_0, window_bounds = array<i64: 1, 16, 1024>}, {transform_indices = @transform_1, window_bounds = array<i64: 1, 16, 1024>}, {pipeline_mode = #tpu.pipeline_mode<synchronous>, transform_indices = @transform_2, window_bounds = array<i64: 2, 16>}, {pipeline_mode = #tpu.pipeline_mode<synchronous>, transform_indices = @transform_3, window_bounds = array<i64: 2, 16>}, {pipeline_mode = #tpu.pipeline_mode<synchronous>, transform_indices = @transform_4, window_bounds = array<i64: 2, 1>}, {pipeline_mode = #tpu.pipeline_mode<synchronous>, transform_indices = @transform_5, window_bounds = array<i64: 16, 2>}, {pipeline_mode = #tpu.pipeline_mode<synchronous>, transform_indices = @transform_6, window_bounds = array<i64: 16, 1>}, {pipeline_mode = #tpu.pipeline_mode<synchronous>, transform_indices = @transform_7, window_bounds = array<i64: 16, 2>}, {pipeline_mode = #tpu.pipeline_mode<synchronous>, transform_indices = @transform_8, window_bounds = array<i64: 16, 1>}, {transform_indices = @transform_9, window_bounds = array<i64: 1, 16, 1024>}, {transform_indices = @transform_10, window_bounds = array<i64: 1, 16, 1024>}]} {
    %c0 = arith.constant 0 : index
    %c0_0 = arith.constant 0 : index
    %c0_1 = arith.constant 0 : index
    %0 = vector.load %arg1[%c0, %c0_0, %c0_1] : memref<1x16x1024xf32, #tpu.memory_space<vmem>>, vector<1x16x1024xf32>
    %1 = vector.shape_cast %0 : vector<1x16x1024xf32> to vector<16x1024xf32>
    %cst = arith.constant dense<0.000000e+00> : vector<16xf32>
    %2 = vector.multi_reduction <add>, %1, %cst [1] : vector<16x1024xf32> to vector<16xf32>
    %3 = vector.shape_cast %2 : vector<16xf32> to vector<16x1xf32>
    %cst_2 = arith.constant 9.765625E-4 : f32
    %4 = vector.broadcast %cst_2 : f32 to vector<16x1xf32>
    %5 = arith.mulf %3, %4 : vector<16x1xf32>
    %c0_3 = arith.constant 0 : index
    %c0_4 = arith.constant 0 : index
    %c0_5 = arith.constant 0 : index
    %6 = vector.load %arg2[%c0_3, %c0_4, %c0_5] : memref<1x16x1024xf32, #tpu.memory_space<vmem>>, vector<1x16x1024xf32>
    %7 = vector.shape_cast %6 : vector<1x16x1024xf32> to vector<16x1024xf32>
    %cst_6 = arith.constant dense<0.000000e+00> : vector<16xf32>
    %8 = vector.multi_reduction <add>, %7, %cst_6 [1] : vector<16x1024xf32> to vector<16xf32>
    %9 = vector.shape_cast %8 : vector<16xf32> to vector<16x1xf32>
    %cst_7 = arith.constant 9.765625E-4 : f32
    %10 = vector.broadcast %cst_7 : f32 to vector<16x1xf32>
    %11 = arith.mulf %9, %10 : vector<16x1xf32>
    %c0_8 = arith.constant 0 : index
    %c0_9 = arith.constant 0 : index
    %12 = vector.load %arg3[%c0_8, %c0_9] : memref<2x16xf32, #tpu.memory_space<vmem>>, vector<2x16xf32>
    %cst_10 = arith.constant dense<0.000000e+00> : vector<2x1xf32>
    %13 = tpu.matmul %12, %5, %cst_10 {dimension_numbers = #tpu.dot_dimension_numbers<[1], [0], [0], [1], [0, 0, 1, 1], [], []>} : vector<2x16xf32>, vector<16x1xf32>, vector<2x1xf32> -> vector<2x1xf32>
    %c0_11 = arith.constant 0 : index
    %c0_12 = arith.constant 0 : index
    %14 = vector.load %arg4[%c0_11, %c0_12] : memref<2x16xf32, #tpu.memory_space<vmem>>, vector<2x16xf32>
    %cst_13 = arith.constant dense<0.000000e+00> : vector<2x1xf32>
    %15 = tpu.matmul %14, %11, %cst_13 {dimension_numbers = #tpu.dot_dimension_numbers<[1], [0], [0], [1], [0, 0, 1, 1], [], []>} : vector<2x16xf32>, vector<16x1xf32>, vector<2x1xf32> -> vector<2x1xf32>
    %16 = arith.addf %13, %15 : vector<2x1xf32>
    %c0_14 = arith.constant 0 : index
    %c0_15 = arith.constant 0 : index
    %17 = vector.load %arg5[%c0_14, %c0_15] : memref<2x1xf32, #tpu.memory_space<vmem>>, vector<2x1xf32>
    %18 = arith.addf %16, %17 : vector<2x1xf32>
    %cst_16 = arith.constant 0.000000e+00 : f32
    %19 = vector.broadcast %cst_16 : f32 to vector<2x1xf32>
    %20 = arith.maximumf %18, %19 : vector<2x1xf32>
    %c0_17 = arith.constant 0 : index
    %c0_18 = arith.constant 0 : index
    %21 = vector.load %arg6[%c0_17, %c0_18] : memref<16x2xf32, #tpu.memory_space<vmem>>, vector<16x2xf32>
    %cst_19 = arith.constant dense<0.000000e+00> : vector<16x1xf32>
    %22 = tpu.matmul %21, %20, %cst_19 {dimension_numbers = #tpu.dot_dimension_numbers<[1], [0], [0], [1], [0, 0, 1, 1], [], []>} : vector<16x2xf32>, vector<2x1xf32>, vector<16x1xf32> -> vector<16x1xf32>
    %c0_20 = arith.constant 0 : index
    %c0_21 = arith.constant 0 : index
    %23 = vector.load %arg7[%c0_20, %c0_21] : memref<16x1xf32, #tpu.memory_space<vmem>>, vector<16x1xf32>
    %24 = arith.addf %22, %23 : vector<16x1xf32>
    %25 = arith.negf %24 : vector<16x1xf32>
    %26 = math.exp %25 : vector<16x1xf32>
    %cst_22 = arith.constant 1.000000e+00 : f32
    %27 = vector.broadcast %cst_22 : f32 to vector<16x1xf32>
    %28 = arith.addf %27, %26 : vector<16x1xf32>
    %29 = arith.divf %27, %28 : vector<16x1xf32>
    %c0_23 = arith.constant 0 : index
    %c0_24 = arith.constant 0 : index
    %30 = vector.load %arg8[%c0_23, %c0_24] : memref<16x2xf32, #tpu.memory_space<vmem>>, vector<16x2xf32>
    %cst_25 = arith.constant dense<0.000000e+00> : vector<16x1xf32>
    %31 = tpu.matmul %30, %20, %cst_25 {dimension_numbers = #tpu.dot_dimension_numbers<[1], [0], [0], [1], [0, 0, 1, 1], [], []>} : vector<16x2xf32>, vector<2x1xf32>, vector<16x1xf32> -> vector<16x1xf32>
    %c0_26 = arith.constant 0 : index
    %c0_27 = arith.constant 0 : index
    %32 = vector.load %arg9[%c0_26, %c0_27] : memref<16x1xf32, #tpu.memory_space<vmem>>, vector<16x1xf32>
    %33 = arith.addf %31, %32 : vector<16x1xf32>
    %34 = arith.negf %33 : vector<16x1xf32>
    %35 = math.exp %34 : vector<16x1xf32>
    %cst_28 = arith.constant 1.000000e+00 : f32
    %36 = vector.broadcast %cst_28 : f32 to vector<16x1xf32>
    %37 = arith.addf %36, %35 : vector<16x1xf32>
    %38 = arith.divf %36, %37 : vector<16x1xf32>
    %c0_29 = arith.constant 0 : index
    %c0_30 = arith.constant 0 : index
    %c0_31 = arith.constant 0 : index
    %39 = vector.load %arg1[%c0_29, %c0_30, %c0_31] : memref<1x16x1024xf32, #tpu.memory_space<vmem>>, vector<1x16x1024xf32>
    %40 = vector.shape_cast %39 : vector<1x16x1024xf32> to vector<16x1024xf32>
    %41 = vector.broadcast %29 : vector<16x1xf32> to vector<16x1024xf32>
    %42 = arith.mulf %40, %41 : vector<16x1024xf32>
    %c0_32 = arith.constant 0 : index
    %c0_33 = arith.constant 0 : index
    %c0_34 = arith.constant 0 : index
    %43 = vector.load %arg10[%c0_32, %c0_33, %c0_34] : memref<1x16x1024xf32, #tpu.memory_space<vmem>>, vector<1x16x1024xf32>
    %44 = vector.shape_cast %43 : vector<1x16x1024xf32> to vector<16x1024xf32>
    %45 = vector.shape_cast %42 : vector<16x1024xf32> to vector<1x16x1024xf32>
    tpu.vector_store %arg10[%c0_32, %c0_33, %c0_34], %45 {strides = array<i32>} : memref<1x16x1024xf32, #tpu.memory_space<vmem>>, vector<1x16x1024xf32>,
    %c0_35 = arith.constant 0 : index
    %c0_36 = arith.constant 0 : index
    %c0_37 = arith.constant 0 : index
    %46 = vector.load %arg2[%c0_35, %c0_36, %c0_37] : memref<1x16x1024xf32, #tpu.memory_space<vmem>>, vector<1x16x1024xf32>
    %47 = vector.shape_cast %46 : vector<1x16x1024xf32> to vector<16x1024xf32>
    %48 = vector.broadcast %38 : vector<16x1xf32> to vector<16x1024xf32>
    %49 = arith.mulf %47, %48 : vector<16x1024xf32>
    %c0_38 = arith.constant 0 : index
    %c0_39 = arith.constant 0 : index
    %c0_40 = arith.constant 0 : index
    %50 = vector.load %arg11[%c0_38, %c0_39, %c0_40] : memref<1x16x1024xf32, #tpu.memory_space<vmem>>, vector<1x16x1024xf32>
    %51 = vector.shape_cast %50 : vector<1x16x1024xf32> to vector<16x1024xf32>
    %52 = vector.shape_cast %49 : vector<16x1024xf32> to vector<1x16x1024xf32>
    tpu.vector_store %arg11[%c0_38, %c0_39, %c0_40], %52 {strides = array<i32>} : memref<1x16x1024xf32, #tpu.memory_space<vmem>>, vector<1x16x1024xf32>,
    return
  }
  func.func @transform_0(%arg0: i32) -> (i32, i32, i32) {
    %c0_i32 = arith.constant 0 : i32
    %c0_i32_0 = arith.constant 0 : i32
    %c0_i32_1 = arith.constant 0 : i32
    return %arg0, %c0_i32, %c0_i32_0 : i32, i32, i32
  }
  func.func @transform_1(%arg0: i32) -> (i32, i32, i32) {
    %c0_i32 = arith.constant 0 : i32
    %c0_i32_0 = arith.constant 0 : i32
    %c0_i32_1 = arith.constant 0 : i32
    return %arg0, %c0_i32, %c0_i32_0 : i32, i32, i32
  }
  func.func @transform_2(%arg0: i32) -> (i32, i32) {
    %c0_i32 = arith.constant 0 : i32
    %c0_i32_0 = arith.constant 0 : i32
    %c0_i32_1 = arith.constant 0 : i32
    return %c0_i32, %c0_i32_0 : i32, i32
  }
  func.func @transform_3(%arg0: i32) -> (i32, i32) {
    %c0_i32 = arith.constant 0 : i32
    %c0_i32_0 = arith.constant 0 : i32
    %c0_i32_1 = arith.constant 0 : i32
    return %c0_i32, %c0_i32_0 : i32, i32
  }
  func.func @transform_4(%arg0: i32) -> (i32, i32) {
    %c0_i32 = arith.constant 0 : i32
    %c0_i32_0 = arith.constant 0 : i32
    %c0_i32_1 = arith.constant 0 : i32
    return %c0_i32, %c0_i32_0 : i32, i32
  }
  func.func @transform_5(%arg0: i32) -> (i32, i32) {
    %c0_i32 = arith.constant 0 : i32
    %c0_i32_0 = arith.constant 0 : i32
    %c0_i32_1 = arith.constant 0 : i32
    return %c0_i32, %c0_i32_0 : i32, i32
  }
  func.func @transform_6(%arg0: i32) -> (i32, i32) {
    %c0_i32 = arith.constant 0 : i32
    %c0_i32_0 = arith.constant 0 : i32
    %c0_i32_1 = arith.constant 0 : i32
    return %c0_i32, %c0_i32_0 : i32, i32
  }
  func.func @transform_7(%arg0: i32) -> (i32, i32) {
    %c0_i32 = arith.constant 0 : i32
    %c0_i32_0 = arith.constant 0 : i32
    %c0_i32_1 = arith.constant 0 : i32
    return %c0_i32, %c0_i32_0 : i32, i32
  }
  func.func @transform_8(%arg0: i32) -> (i32, i32) {
    %c0_i32 = arith.constant 0 : i32
    %c0_i32_0 = arith.constant 0 : i32
    %c0_i32_1 = arith.constant 0 : i32
    return %c0_i32, %c0_i32_0 : i32, i32
  }
  func.func @transform_9(%arg0: i32) -> (i32, i32, i32) {
    %c0_i32 = arith.constant 0 : i32
    %c0_i32_0 = arith.constant 0 : i32
    %c0_i32_1 = arith.constant 0 : i32
    return %arg0, %c0_i32, %c0_i32_0 : i32, i32, i32
  }
  func.func @transform_10(%arg0: i32) -> (i32, i32, i32) {
    %c0_i32 = arith.constant 0 : i32
    %c0_i32_0 = arith.constant 0 : i32
    %c0_i32_1 = arith.constant 0 : i32
    return %arg0, %c0_i32, %c0_i32_0 : i32, i32, i32
  }
}

</mosaic_0001>

<llo_original>
// kernel: tpu_custom_call.1
$region0: #{tpu_custom_call.1}
  #allocation0 [shape = 'u32[]', space=smem, size = 0x4, offset = 0x4, fixed_abs, tag = 'smem constant byte address 0x4 - core index']
  #allocation1 [shape = 'u32[144,128]{1,0:T(1,128)}', space=vmem, size = 0x12000, scoped, tag = 'internal scratch']
  %s0 = inlined_call_operand.hbm [shape: f32[2,16,1024], index: 0, kind: input, shape index: {}]
  %s1 = inlined_call_operand.hbm [shape: f32[2,16,1024], index: 1, kind: input, shape index: {}]
  %s2 = inlined_call_operand.vmem [shape: f32[2,16], index: 2, kind: input, shape index: {}]
  %s3 = inlined_call_operand.vmem [shape: f32[2,16], index: 3, kind: input, shape index: {}]
  %s4 = inlined_call_operand.vmem [shape: f32[2,1], index: 4, kind: input, shape index: {}]
  %s5 = inlined_call_operand.vmem [shape: f32[16,2], index: 5, kind: input, shape index: {}]
  %s6 = inlined_call_operand.vmem [shape: f32[16,1], index: 6, kind: input, shape index: {}]
  %s7 = inlined_call_operand.vmem [shape: f32[16,2], index: 7, kind: input, shape index: {}]
  %s8 = inlined_call_operand.vmem [shape: f32[16,1], index: 8, kind: input, shape index: {}]
  %s9 = inlined_call_operand.hbm [shape: f32[2,16,1024], index: 9, kind: output, shape index: {0}]
  %s10 = inlined_call_operand.hbm [shape: f32[2,16,1024], index: 10, kind: output, shape index: {1}]
  %11 = xla_tuple %s9, %s10
  %s12 = sld [smem:[#allocation0]]
  $region85: #{tpu_custom_call.1} parent=0
    _
  %s14 = ssub.s32 1, %s12
  %s15 = scalar_select 0, %s14, %s12
  $region1: #{tpu_custom_call.1} parent=0
    #allocation2 [shape = 'u8[131072]{0}', space=vmem, size = 0x20000, scoped, tag = 'input window, operand 0']
    #allocation3 [shape = 's32[2]{0}', space=sflag, size = 0x8, scoped, tag = 'scoped memory for tpu_custom_call.1']
    #allocation4 [shape = 's32[2]{0}', space=sflag, size = 0x8, scoped, tag = 'scoped memory for tpu_custom_call.1']
    #allocation5 [shape = 'u8[131072]{0}', space=vmem, size = 0x20000, scoped, tag = 'input window, operand 1']
    #allocation6 [shape = 's32[2]{0}', space=sflag, size = 0x8, scoped, tag = 'scoped memory for tpu_custom_call.1']
    #allocation7 [shape = 'u8[131072]{0}', space=vmem, size = 0x20000, scoped, tag = 'output window, operand 0']
    #allocation8 [shape = 'u8[131072]{0}', space=vmem, size = 0x20000, scoped, tag = 'output window, operand 1']
    #allocation9 [shape = 's32[2]{0}', space=sflag, size = 0x8, scoped, tag = 'scoped memory for tpu_custom_call.1']
    %16 = vsyncpa [#allocation3], 0
    %s17 = scalar_lea.sflag [#allocation3], 1
    %18 = vsyncpa %s17, 0
    %19 = vsyncpa [#allocation6], 0
    %s20 = scalar_lea.sflag [#allocation6], 1
    %21 = vsyncpa %s20, 0
    %22 = vsyncpa [#allocation4], 0
    %s23 = scalar_lea.sflag [#allocation4], 1
    %24 = vsyncpa %s23, 0
    %25 = vsyncpa [#allocation9], 0
    %s26 = scalar_lea.sflag [#allocation9], 1
    %27 = vsyncpa %s26, 0
    loop: start=0, step=1, limit=4
    $region2: #{tpu_custom_call.1} parent=1 // loop_pre_header
      _
    $region3: #{tpu_custom_call.1} parent=1 // loop_header
      %s29 = sphi 0, %s33
      %p30 = scmp.ge.s32.totalorder %s29, 4
      %s39 = sphi 0, %s41
      %s42 = sphi 0, %s39
      %s43 = sphi 0, %s42
      %s59 = sphi 0, %s43
      %s65 = sphi 0, %s67
      %s68 = sphi 0, %s65
      %s69 = sphi 0, %s68
      %s85 = sphi 0, %s69
      %s89 = sphi 0, %s89
      %s91 = sphi 0, %s89
      %s92 = sphi 0, %s91
      %s106 = sphi 0, %s92
      %s110 = sphi 0, %s110
      %s112 = sphi 0, %s110
      %s113 = sphi 0, %s112
      %s127 = sphi 0, %s113
      %s131 = sphi 0, %s131
      %s133 = sphi 0, %s131
      %s134 = sphi 0, %s133
      %s148 = sphi 0, %s134
      %s152 = sphi 0, %s152
      %s154 = sphi 0, %s152
      %s155 = sphi 0, %s154
      %s169 = sphi 0, %s155
      %s173 = sphi 0, %s173
      %s175 = sphi 0, %s173
      %s176 = sphi 0, %s175
      %s190 = sphi 0, %s176
      %s194 = sphi 0, %s194
      %s196 = sphi 0, %s194
      %s197 = sphi 0, %s196
      %s211 = sphi 0, %s197
      %s215 = sphi 0, %s215
      %s217 = sphi 0, %s215
      %s218 = sphi 0, %s217
      %s232 = sphi 0, %s218
      %s238 = sphi 0, %s240
      %s241 = sphi 0, %s238
      %s242 = sphi 0, %s241
      %s258 = sphi 0, %s242
      %s264 = sphi 0, %s266
      %s267 = sphi 0, %s264
      %s268 = sphi 0, %s267
      %s284 = sphi 0, %s268
    $region4: #{tpu_custom_call.1} parent=1 // loop_header_branch
      %32 = sbr.rel (%p30) target = $region8
    $region5: #{tpu_custom_call.1} parent=1 // loop_body
      %s34 = ssub.s32 %s29, 1
      %s35 = ssub.s32 %s29, 2
      %s36 = sadd.s32 %s29, 1
      %s37 = ssub.s32 %s29, %s36
      %p38 = scmp.eq.s32.totalorder %s37, 0
      %s40 = sadd.s32 %s39, 1
      %s41 = scalar_select %p38, %s39, %s40
      %p44 = pneg %p38
      %p45 = scmp.eq.s32.totalorder %s29, 1
      %p46 = por %p44, %p45
      %p47 = scmp.ne.s32.totalorder %s39, %s42
      %p48 = scmp.eq.s32.totalorder %s29, 0
      %p49 = por %p47, %p48
      %p50 = scmp.ne.s32.totalorder %s39, %s42
      %p51 = scmp.eq.s32.totalorder %s34, 1
      %p52 = por %p50, %p51
      %p53 = scmp.ne.s32.totalorder %s42, %s43
      %p54 = scmp.eq.s32.totalorder %s34, 0
      %p55 = por %p53, %p54
      %p56 = scmp.ne.s32.totalorder %s42, %s43
      %p57 = scmp.eq.s32.totalorder %s35, 1
      %p58 = por %p56, %p57
      %p60 = scmp.ne.s32.totalorder %s43, %s59
      %p61 = scmp.eq.s32.totalorder %s35, 0
      %p62 = por %p60, %p61
      %s63 = ssub.s32 %s29, %s36
      %p64 = scmp.eq.s32.totalorder %s63, 0
      %s66 = sadd.s32 %s65, 1
      %s67 = scalar_select %p64, %s65, %s66
      %p70 = pneg %p64
      %p71 = scmp.eq.s32.totalorder %s29, 1
      %p72 = por %p70, %p71
      %p73 = scmp.ne.s32.totalorder %s65, %s68
      %p74 = scmp.eq.s32.totalorder %s29, 0
      %p75 = por %p73, %p74
      %p76 = scmp.ne.s32.totalorder %s65, %s68
      %p77 = scmp.eq.s32.totalorder %s34, 1
      %p78 = por %p76, %p77
      %p79 = scmp.ne.s32.totalorder %s68, %s69
      %p80 = scmp.eq.s32.totalorder %s34, 0
      %p81 = por %p79, %p80
      %p82 = scmp.ne.s32.totalorder %s68, %s69
      %p83 = scmp.eq.s32.totalorder %s35, 1
      %p84 = por %p82, %p83
      %p86 = scmp.ne.s32.totalorder %s69, %s85
      %p87 = scmp.eq.s32.totalorder %s35, 0
      %p88 = por %p86, %p87
      %s90 = sadd.s32 %s89, 1
      %p93 = scmp.eq.s32.totalorder %s29, 1
      %p94 = scmp.ne.s32.totalorder %s89, %s91
      %p95 = scmp.eq.s32.totalorder %s29, 0
      %p96 = por %p94, %p95
      %p97 = scmp.ne.s32.totalorder %s89, %s91
      %p98 = scmp.eq.s32.totalorder %s34, 1
      %p99 = por %p97, %p98
      %p100 = scmp.ne.s32.totalorder %s91, %s92
      %p101 = scmp.eq.s32.totalorder %s34, 0
      %p102 = por %p100, %p101
      %p103 = scmp.ne.s32.totalorder %s91, %s92
      %p104 = scmp.eq.s32.totalorder %s35, 1
      %p105 = por %p103, %p104
      %p107 = scmp.ne.s32.totalorder %s92, %s106
      %p108 = scmp.eq.s32.totalorder %s35, 0
      %p109 = por %p107, %p108
      %s111 = sadd.s32 %s110, 1
      %p114 = scmp.eq.s32.totalorder %s29, 1
      %p115 = scmp.ne.s32.totalorder %s110, %s112
      %p116 = scmp.eq.s32.totalorder %s29, 0
      %p117 = por %p115, %p116
      %p118 = scmp.ne.s32.totalorder %s110, %s112
      %p119 = scmp.eq.s32.totalorder %s34, 1
      %p120 = por %p118, %p119
      %p121 = scmp.ne.s32.totalorder %s112, %s113
      %p122 = scmp.eq.s32.totalorder %s34, 0
      %p123 = por %p121, %p122
      %p124 = scmp.ne.s32.totalorder %s112, %s113
      %p125 = scmp.eq.s32.totalorder %s35, 1
      %p126 = por %p124, %p125
      %p128 = scmp.ne.s32.totalorder %s113, %s127
      %p129 = scmp.eq.s32.totalorder %s35, 0
      %p130 = por %p128, %p129
      %s132 = sadd.s32 %s131, 1
      %p135 = scmp.eq.s32.totalorder %s29, 1
      %p136 = scmp.ne.s32.totalorder %s131, %s133
      %p137 = scmp.eq.s32.totalorder %s29, 0
      %p138 = por %p136, %p137
      %p139 = scmp.ne.s32.totalorder %s131, %s133
      %p140 = scmp.eq.s32.totalorder %s34, 1
      %p141 = por %p139, %p140
      %p142 = scmp.ne.s32.totalorder %s133, %s134
      %p143 = scmp.eq.s32.totalorder %s34, 0
      %p144 = por %p142, %p143
      %p145 = scmp.ne.s32.totalorder %s133, %s134
      %p146 = scmp.eq.s32.totalorder %s35, 1
      %p147 = por %p145, %p146
      %p149 = scmp.ne.s32.totalorder %s134, %s148
      %p150 = scmp.eq.s32.totalorder %s35, 0
      %p151 = por %p149, %p150
      %s153 = sadd.s32 %s152, 1
      %p156 = scmp.eq.s32.totalorder %s29, 1
      %p157 = scmp.ne.s32.totalorder %s152, %s154
      %p158 = scmp.eq.s32.totalorder %s29, 0
      %p159 = por %p157, %p158
      %p160 = scmp.ne.s32.totalorder %s152, %s154
      %p161 = scmp.eq.s32.totalorder %s34, 1
      %p162 = por %p160, %p161
      %p163 = scmp.ne.s32.totalorder %s154, %s155
      %p164 = scmp.eq.s32.totalorder %s34, 0
      %p165 = por %p163, %p164
      %p166 = scmp.ne.s32.totalorder %s154, %s155
      %p167 = scmp.eq.s32.totalorder %s35, 1
      %p168 = por %p166, %p167
      %p170 = scmp.ne.s32.totalorder %s155, %s169
      %p171 = scmp.eq.s32.totalorder %s35, 0
      %p172 = por %p170, %p171
      %s174 = sadd.s32 %s173, 1
      %p177 = scmp.eq.s32.totalorder %s29, 1
      %p178 = scmp.ne.s32.totalorder %s173, %s175
      %p179 = scmp.eq.s32.totalorder %s29, 0
      %p180 = por %p178, %p179
      %p181 = scmp.ne.s32.totalorder %s173, %s175
      %p182 = scmp.eq.s32.totalorder %s34, 1
      %p183 = por %p181, %p182
      %p184 = scmp.ne.s32.totalorder %s175, %s176
      %p185 = scmp.eq.s32.totalorder %s34, 0
      %p186 = por %p184, %p185
      %p187 = scmp.ne.s32.totalorder %s175, %s176
      %p188 = scmp.eq.s32.totalorder %s35, 1
      %p189 = por %p187, %p188
      %p191 = scmp.ne.s32.totalorder %s176, %s190
      %p192 = scmp.eq.s32.totalorder %s35, 0
      %p193 = por %p191, %p192
      %s195 = sadd.s32 %s194, 1
      %p198 = scmp.eq.s32.totalorder %s29, 1
      %p199 = scmp.ne.s32.totalorder %s194, %s196
      %p200 = scmp.eq.s32.totalorder %s29, 0
      %p201 = por %p199, %p200
      %p202 = scmp.ne.s32.totalorder %s194, %s196
      %p203 = scmp.eq.s32.totalorder %s34, 1
      %p204 = por %p202, %p203
      %p205 = scmp.ne.s32.totalorder %s196, %s197
      %p206 = scmp.eq.s32.totalorder %s34, 0
      %p207 = por %p205, %p206
      %p208 = scmp.ne.s32.totalorder %s196, %s197
      %p209 = scmp.eq.s32.totalorder %s35, 1
      %p210 = por %p208, %p209
      %p212 = scmp.ne.s32.totalorder %s197, %s211
      %p213 = scmp.eq.s32.totalorder %s35, 0
      %p214 = por %p212, %p213
      %s216 = sadd.s32 %s215, 1
      %p219 = scmp.eq.s32.totalorder %s29, 1
      %p220 = scmp.ne.s32.totalorder %s215, %s217
      %p221 = scmp.eq.s32.totalorder %s29, 0
      %p222 = por %p220, %p221
      %p223 = scmp.ne.s32.totalorder %s215, %s217
      %p224 = scmp.eq.s32.totalorder %s34, 1
      %p225 = por %p223, %p224
      %p226 = scmp.ne.s32.totalorder %s217, %s218
      %p227 = scmp.eq.s32.totalorder %s34, 0
      %p228 = por %p226, %p227
      %p229 = scmp.ne.s32.totalorder %s217, %s218
      %p230 = scmp.eq.s32.totalorder %s35, 1
      %p231 = por %p229, %p230
      %p233 = scmp.ne.s32.totalorder %s218, %s232
      %p234 = scmp.eq.s32.totalorder %s35, 0
      %p235 = por %p233, %p234
      %s236 = ssub.s32 %s29, %s36
      %p237 = scmp.eq.s32.totalorder %s236, 0
      %s239 = sadd.s32 %s238, 1
      %s240 = scalar_select %p237, %s238, %s239
      %p243 = pneg %p237
      %p244 = scmp.eq.s32.totalorder %s29, 1
      %p245 = por %p243, %p244
      %p246 = scmp.ne.s32.totalorder %s238, %s241
      %p247 = scmp.eq.s32.totalorder %s29, 0
      %p248 = por %p246, %p247
      %p249 = scmp.ne.s32.totalorder %s238, %s241
      %p250 = scmp.eq.s32.totalorder %s34, 1
      %p251 = por %p249, %p250
      %p252 = scmp.ne.s32.totalorder %s241, %s242
      %p253 = scmp.eq.s32.totalorder %s34, 0
      %p254 = por %p252, %p253
      %p255 = scmp.ne.s32.totalorder %s241, %s242
      %p256 = scmp.eq.s32.totalorder %s35, 1
      %p257 = por %p255, %p256
      %p259 = scmp.ne.s32.totalorder %s242, %s258
      %p260 = scmp.eq.s32.totalorder %s35, 0
      %p261 = por %p259, %p260
      %s262 = ssub.s32 %s29, %s36
      %p263 = scmp.eq.s32.totalorder %s262, 0
      %s265 = sadd.s32 %s264, 1
      %s266 = scalar_select %p263, %s264, %s265
      %p269 = pneg %p263
      %p270 = scmp.eq.s32.totalorder %s29, 1
      %p271 = por %p269, %p270
      %p272 = scmp.ne.s32.totalorder %s264, %s267
      %p273 = scmp.eq.s32.totalorder %s29, 0
      %p274 = por %p272, %p273
      %p275 = scmp.ne.s32.totalorder %s264, %s267
      %p276 = scmp.eq.s32.totalorder %s34, 1
      %p277 = por %p275, %p276
      %p278 = scmp.ne.s32.totalorder %s267, %s268
      %p279 = scmp.eq.s32.totalorder %s34, 0
      %p280 = por %p278, %p279
      %p281 = scmp.ne.s32.totalorder %s267, %s268
      %p282 = scmp.eq.s32.totalorder %s35, 1
      %p283 = por %p281, %p282
      %p285 = scmp.ne.s32.totalorder %s268, %s284
      %p286 = scmp.eq.s32.totalorder %s35, 0
      %p287 = por %p285, %p286
      %p288 = scmp.le.s32.totalorder 1, %s29
      %p289 = scmp.lt.s32.totalorder %s29, 3
      %p290 = pnand %p288, %p289
      %p291 = pneg %p290
      // Predicated region
      $region9: #{tpu_custom_call.1} parent=5 // pred_check
        _
      $region10: #{tpu_custom_call.1} parent=5 // pred_check_branch
        %293 = sbr.rel (%p290) target = $region12
      $region11: #{tpu_custom_call.1} parent=5 // pred_region
        %s294 = ssub.s32 %s29, 1
        // Predicated region
        $region13: #{tpu_custom_call.1} parent=11 // pred_check
          %p295 = pneg %p102
        $region14: #{tpu_custom_call.1} parent=11 // pred_check_branch
          %297 = sbr.rel (%p295) target = $region16
        $region15: #{tpu_custom_call.1} parent=11 // pred_region
          _
        $region16: #{tpu_custom_call.1} parent=11 // pred_fallthru
          _
        // Predicated region
        $region17: #{tpu_custom_call.1} parent=11 // pred_check
          %p298 = pneg %p123
        $region18: #{tpu_custom_call.1} parent=11 // pred_check_branch
          %300 = sbr.rel (%p298) target = $region20
        $region19: #{tpu_custom_call.1} parent=11 // pred_region
          _
        $region20: #{tpu_custom_call.1} parent=11 // pred_fallthru
          _
        // Predicated region
        $region21: #{tpu_custom_call.1} parent=11 // pred_check
          %p301 = pneg %p144
        $region22: #{tpu_custom_call.1} parent=11 // pred_check_branch
          %303 = sbr.rel (%p301) target = $region24
        $region23: #{tpu_custom_call.1} parent=11 // pred_region
          _
        $region24: #{tpu_custom_call.1} parent=11 // pred_fallthru
          _
        // Predicated region
        $region25: #{tpu_custom_call.1} parent=11 // pred_check
          %p304 = pneg %p165
        $region26: #{tpu_custom_call.1} parent=11 // pred_check_branch
          %306 = sbr.rel (%p304) target = $region28
        $region27: #{tpu_custom_call.1} parent=11 // pred_region
          _
        $region28: #{tpu_custom_call.1} parent=11 // pred_fallthru
          _
        // Predicated region
        $region29: #{tpu_custom_call.1} parent=11 // pred_check
          %p307 = pneg %p186
        $region30: #{tpu_custom_call.1} parent=11 // pred_check_branch
          %309 = sbr.rel (%p307) target = $region32
        $region31: #{tpu_custom_call.1} parent=11 // pred_region
          _
        $region32: #{tpu_custom_call.1} parent=11 // pred_fallthru
          _
        // Predicated region
        $region33: #{tpu_custom_call.1} parent=11 // pred_check
          %p310 = pneg %p207
        $region34: #{tpu_custom_call.1} parent=11 // pred_check_branch
          %312 = sbr.rel (%p310) target = $region36
        $region35: #{tpu_custom_call.1} parent=11 // pred_region
          _
        $region36: #{tpu_custom_call.1} parent=11 // pred_fallthru
          _
        // Predicated region
        $region37: #{tpu_custom_call.1} parent=11 // pred_check
          %p313 = pneg %p228
        $region38: #{tpu_custom_call.1} parent=11 // pred_check_branch
          %315 = sbr.rel (%p313) target = $region40
        $region39: #{tpu_custom_call.1} parent=11 // pred_region
          _
        $region40: #{tpu_custom_call.1} parent=11 // pred_fallthru
          _
      $region12: #{tpu_custom_call.1} parent=5 // pred_fallthru
        _
      %p316 = scmp.lt.s32.totalorder %s29, 2
      // Predicated region
      $region41: #{tpu_custom_call.1} parent=5 // pred_check
        %p317 = pneg %p316
      $region42: #{tpu_custom_call.1} parent=5 // pred_check_branch
        %319 = sbr.rel (%p317) target = $region44
      $region43: #{tpu_custom_call.1} parent=5 // pred_region
        // Predicated region
        $region45: #{tpu_custom_call.1} parent=43 // pred_check
          %p320 = pneg %p49
        $region46: #{tpu_custom_call.1} parent=43 // pred_check_branch
          %322 = sbr.rel (%p320) target = $region48
        $region47: #{tpu_custom_call.1} parent=43 // pred_region
          %s323 = sand.u32 %s39, 1
          %s324 = scalar_lea.sflag [#allocation3], %s323
          %s325 = sand.u32 %s39, 1
          %s326 = smul.addr %s325, 128
          %s327 = scalar_lea.vmem [#allocation2], %s326
          %s329 = ssub.s32 2048, 2048
          %330 = vsyncadd %s324, %s329
          %s331 = smul.addr %s29, 16
          %s332 = smul.addr %s331, 128
          %s333 = scalar_lea.hbm %s0, %s332
          %s334 = sshll.u32 %s327, 4
          %s335 = int_to_ptr.vmem [resolvable:$true] %s334
          %340 = dma.hbm_to_vmem [thread:$0]  %s333, 2048, %s335, %s324, 1024, 1024, 64
        $region48: #{tpu_custom_call.1} parent=43 // pred_fallthru
          _
        // Predicated region
        $region49: #{tpu_custom_call.1} parent=43 // pred_check
          %p341 = pneg %p75
        $region50: #{tpu_custom_call.1} parent=43 // pred_check_branch
          %343 = sbr.rel (%p341) target = $region52
        $region51: #{tpu_custom_call.1} parent=43 // pred_region
          %s344 = sand.u32 %s65, 1
          %s345 = scalar_lea.sflag [#allocation6], %s344
          %s346 = sand.u32 %s65, 1
          %s347 = smul.addr %s346, 128
          %s348 = scalar_lea.vmem [#allocation5], %s347
          %s350 = ssub.s32 2048, 2048
          %351 = vsyncadd %s345, %s350
          %s352 = smul.addr %s29, 16
          %s353 = smul.addr %s352, 128
          %s354 = scalar_lea.hbm %s1, %s353
          %s355 = sshll.u32 %s348, 4
          %s356 = int_to_ptr.vmem [resolvable:$true] %s355
          %361 = dma.hbm_to_vmem [thread:$0]  %s354, 2048, %s356, %s345, 1024, 1024, 64
        $region52: #{tpu_custom_call.1} parent=43 // pred_fallthru
          _
      $region44: #{tpu_custom_call.1} parent=5 // pred_fallthru
        _
      %p362 = scmp.le.s32.totalorder 1, %s29
      %p363 = scmp.lt.s32.totalorder %s29, 3
      %p364 = pnand %p362, %p363
      %p365 = pneg %p364
      // Predicated region
      $region53: #{tpu_custom_call.1} parent=5 // pred_check
        _
      $region54: #{tpu_custom_call.1} parent=5 // pred_check_branch
        %367 = sbr.rel (%p364) target = $region56
      $region55: #{tpu_custom_call.1} parent=5 // pred_region
        %s368 = ssub.s32 %s29, 1
        %s369 = sand.u32 %s42, 1
        %s370 = scalar_lea.sflag [#allocation3], %s369
        %s371 = sand.u32 %s42, 1
        %s372 = smul.addr %s371, 128
        %s373 = scalar_lea.vmem [#allocation2], %s372
        // Predicated region
        $region57: #{tpu_custom_call.1} parent=55 // pred_check
          %p374 = pneg %p55
        $region58: #{tpu_custom_call.1} parent=55 // pred_check_branch
          %376 = sbr.rel (%p374) target = $region60
        $region59: #{tpu_custom_call.1} parent=55 // pred_region
          %377 = dma.done %s370, 2048
        $region60: #{tpu_custom_call.1} parent=55 // pred_fallthru
          _
        %s378 = sand.u32 %s68, 1
        %s379 = scalar_lea.sflag [#allocation6], %s378
        %s380 = sand.u32 %s68, 1
        %s381 = smul.addr %s380, 128
        %s382 = scalar_lea.vmem [#allocation5], %s381
        // Predicated region
        $region61: #{tpu_custom_call.1} parent=55 // pred_check
          %p383 = pneg %p81
        $region62: #{tpu_custom_call.1} parent=55 // pred_check_branch
          %385 = sbr.rel (%p383) target = $region64
        $region63: #{tpu_custom_call.1} parent=55 // pred_region
          %386 = dma.done %s379, 2048
        $region64: #{tpu_custom_call.1} parent=55 // pred_fallthru
          _
        %s387 = sand.u32 %s42, 1
        %s388 = scalar_lea.sflag [#allocation3], %s387
        %s389 = sand.u32 %s42, 1
        %s390 = smul.addr %s389, 128
        %s391 = scalar_lea.vmem [#allocation2], %s390
        %p392 = pneg %p55
        %p393 = pneg %p52
        %s394 = sand.u32 %s68, 1
        %s395 = scalar_lea.sflag [#allocation6], %s394
        %s396 = sand.u32 %s68, 1
        %s397 = smul.addr %s396, 128
        %s398 = scalar_lea.vmem [#allocation5], %s397
        %p399 = pneg %p81
        %p400 = pneg %p78
        %p401 = pneg %p102
        %p402 = pneg %p99
        %p403 = pneg %p123
        %p404 = pneg %p120
        %p405 = pneg %p144
        %p406 = pneg %p141
        %p407 = pneg %p165
        %p408 = pneg %p162
        %p409 = pneg %p186
        %p410 = pneg %p183
        %p411 = pneg %p207
        %p412 = pneg %p204
        %p413 = pneg %p228
        %p414 = pneg %p225
        %p415 = pneg %p254
        %p416 = pneg %p251
        %s417 = sand.u32 %s241, 1
        %s418 = scalar_lea.sflag [#allocation4], %s417
        %s419 = sand.u32 %s241, 1
        %s420 = smul.addr %s419, 128
        %s421 = scalar_lea.vmem [#allocation7], %s420
        %p422 = pneg %p280
        %p423 = pneg %p277
        %s424 = sand.u32 %s267, 1
        %s425 = scalar_lea.sflag [#allocation9], %s424
        %s426 = sand.u32 %s267, 1
        %s427 = smul.addr %s426, 128
        %s428 = scalar_lea.vmem [#allocation8], %s427
        %v429 = vld [vmem:[%s373] sm:$0xff]
        %v430 = vld [vmem:[%s373 + $0x8] sm:$0xff]
        %v431 = vld [vmem:[%s373 + $0x10] sm:$0xff]
        %v432 = vld [vmem:[%s373 + $0x18] sm:$0xff]
        %v433 = vld [vmem:[%s373 + $0x20] sm:$0xff]
        %v434 = vld [vmem:[%s373 + $0x28] sm:$0xff]
        %v435 = vld [vmem:[%s373 + $0x30] sm:$0xff]
        %v436 = vld [vmem:[%s373 + $0x38] sm:$0xff]
        %v437 = vld [vmem:[%s373 + $0x40] sm:$0xff]
        %v438 = vld [vmem:[%s373 + $0x48] sm:$0xff]
        %v439 = vld [vmem:[%s373 + $0x50] sm:$0xff]
        %v440 = vld [vmem:[%s373 + $0x58] sm:$0xff]
        %v441 = vld [vmem:[%s373 + $0x60] sm:$0xff]
        %v442 = vld [vmem:[%s373 + $0x68] sm:$0xff]
        %v443 = vld [vmem:[%s373 + $0x70] sm:$0xff]
        %v444 = vld [vmem:[%s373 + $0x78] sm:$0xff]
        %v445 = vadd.f32 %v429, %v430
        %v446 = vadd.f32 %v445, %v431
        %v447 = vadd.f32 %v446, %v432
        %v448 = vadd.f32 %v447, %v433
        %v449 = vadd.f32 %v448, %v434
        %v450 = vadd.f32 %v449, %v435
        %v451 = vadd.f32 %v450, %v436
        %452 = vadd.xlane.f32.xlu0 %v451
        %v453 = vpop.xlane.xlu0 %452
        %v454 = vadd.f32 %v437, %v438
        %v455 = vadd.f32 %v454, %v439
        %v456 = vadd.f32 %v455, %v440
        %v457 = vadd.f32 %v456, %v441
        %v458 = vadd.f32 %v457, %v442
        %v459 = vadd.f32 %v458, %v443
        %v460 = vadd.f32 %v459, %v444
        %461 = vadd.xlane.f32.xlu0 %v460
        %v462 = vpop.xlane.xlu0 %461
        %v463 = vmul.f32 %v453, 0.0009765625
        %v464 = vmul.f32 %v462, 0.0009765625
        %v465 = vld [vmem:[%s382] sm:$0xff]
        %v466 = vld [vmem:[%s382 + $0x8] sm:$0xff]
        %v467 = vld [vmem:[%s382 + $0x10] sm:$0xff]
        %v468 = vld [vmem:[%s382 + $0x18] sm:$0xff]
        %v469 = vld [vmem:[%s382 + $0x20] sm:$0xff]
        %v470 = vld [vmem:[%s382 + $0x28] sm:$0xff]
        %v471 = vld [vmem:[%s382 + $0x30] sm:$0xff]
        %v472 = vld [vmem:[%s382 + $0x38] sm:$0xff]
        %v473 = vld [vmem:[%s382 + $0x40] sm:$0xff]
        %v474 = vld [vmem:[%s382 + $0x48] sm:$0xff]
        %v475 = vld [vmem:[%s382 + $0x50] sm:$0xff]
        %v476 = vld [vmem:[%s382 + $0x58] sm:$0xff]
        %v477 = vld [vmem:[%s382 + $0x60] sm:$0xff]
        %v478 = vld [vmem:[%s382 + $0x68] sm:$0xff]
        %v479 = vld [vmem:[%s382 + $0x70] sm:$0xff]
        %v480 = vld [vmem:[%s382 + $0x78] sm:$0xff]
        %v481 = vadd.f32 %v465, %v466
        %v482 = vadd.f32 %v481, %v467
        %v483 = vadd.f32 %v482, %v468
        %v484 = vadd.f32 %v483, %v469
        %v485 = vadd.f32 %v484, %v470
        %v486 = vadd.f32 %v485, %v471
        %v487 = vadd.f32 %v486, %v472
        %488 = vadd.xlane.f32.xlu0 %v487
        %v489 = vpop.xlane.xlu0 %488
        %v490 = vadd.f32 %v473, %v474
        %v491 = vadd.f32 %v490, %v475
        %v492 = vadd.f32 %v491, %v476
        %v493 = vadd.f32 %v492, %v477
        %v494 = vadd.f32 %v493, %v478
        %v495 = vadd.f32 %v494, %v479
        %v496 = vadd.f32 %v495, %v480
        %497 = vadd.xlane.f32.xlu0 %v496
        %v498 = vpop.xlane.xlu0 %497
        %v499 = vmul.f32 %v489, 0.0009765625
        %v500 = vmul.f32 %v498, 0.0009765625
        %v501 = vld [vmem:[%s2] sm:$0x3]
        %v502 = vld [vmem:[%s3] sm:$0x3]
        %vm503 = vcmask 130048
        %v505 = vsel %vm503, %v502, 0
        %507 = vmatprep.subr.mxu0 0.0
        %508 = vmatpush1.msra.mxu0 0.0
        %509 = vmatprep.subr.mxu0 0.0
        %510 = vmatpush1.msra.mxu0 0.0
        %511 = vmatprep.subr.mxu0 0.0
        %512 = vmatpush1.msra.mxu0 0.0
        %513 = vmatprep.subr.mxu0 0.0
        %514 = vmatpush1.msra.mxu0 0.0
        %515 = vmatprep.subr.mxu0 0.0
        %516 = vmatpush1.msra.mxu0 0.0
        %517 = vmatprep.subr.mxu0 0.0
        %518 = vmatpush1.msra.mxu0 0.0
        %519 = vmatprep.subr.mxu0 0.0
        %520 = vmatpush1.msra.mxu0 0.0
        %521 = vmatprep.subr.mxu0 0.0
        %522 = vmatpush1.msra.mxu0 0.0
        %523 = vmatprep.subr.mxu0 0.0
        %524 = vmatpush1.msra.mxu0 0.0
        %525 = vmatprep.subr.mxu0 0.0
        %526 = vmatpush1.msra.mxu0 0.0
        %527 = vmatprep.subr.mxu0 0.0
        %528 = vmatpush1.msra.mxu0 0.0
        %529 = vmatprep.subr.mxu0 0.0
        %530 = vmatpush1.msra.mxu0 0.0
        %531 = vmatprep.subr.mxu0 0.0
        %532 = vmatpush1.msra.mxu0 0.0
        %533 = vmatprep.subr.mxu0 0.0
        %534 = vmatpush1.msra.mxu0 0.0
        %535 = vmatprep.subr.mxu0 0.0
        %536 = vmatpush1.msra.mxu0 %v500
        %537 = vmatprep.subr.mxu0 0.0
        %538 = vmatpush1.msra.mxu0 %v499
        %539 = vmatprep.subr.mxu0 0.0
        %540 = vmatpush2.msra.mxu0 0.0
        %541 = vmatprep.subr.mxu0 0.0
        %542 = vmatpush2.msra.mxu0 0.0
        %543 = vmatprep.subr.mxu0 0.0
        %544 = vmatpush2.msra.mxu0 0.0
        %545 = vmatprep.subr.mxu0 0.0
        %546 = vmatpush2.msra.mxu0 0.0
        %547 = vmatprep.subr.mxu0 0.0
        %548 = vmatpush2.msra.mxu0 0.0
        %549 = vmatprep.subr.mxu0 0.0
        %550 = vmatpush2.msra.mxu0 0.0
        %551 = vmatprep.subr.mxu0 0.0
        %552 = vmatpush2.msra.mxu0 0.0
        %553 = vmatprep.subr.mxu0 0.0
        %554 = vmatpush2.msra.mxu0 0.0
        %555 = vmatprep.subr.mxu0 0.0
        %556 = vmatpush2.msra.mxu0 0.0
        %557 = vmatprep.subr.mxu0 0.0
        %558 = vmatpush2.msra.mxu0 0.0
        %559 = vmatprep.subr.mxu0 0.0
        %560 = vmatpush2.msra.mxu0 0.0
        %561 = vmatprep.subr.mxu0 0.0
        %562 = vmatpush2.msra.mxu0 0.0
        %563 = vmatprep.subr.mxu0 0.0
        %564 = vmatpush2.msra.mxu0 0.0
        %565 = vmatprep.subr.mxu0 0.0
        %566 = vmatpush2.msra.mxu0 0.0
        %567 = vmatprep.subr.mxu0 0.0
        %568 = vmatpush2.msra.mxu0 0.0
        %569 = vmatprep.subr.mxu0 0.0
        %570 = vmatpush2.msra.mxu0 0.0
        %571 = vmatprep.mubr.f32.mxu0 0.0
        %572 = vmatmul.mubr.f32.gmra.mxu0 %v505
        %v573 = vpop.f32.mrf.mxu0
        %v574 = vadd.f32 0.0, %v573
        %v575 = vpop.f32.mrf.mxu0
        %576 = vdwg.mxu0
        %v578 = vsel %vm503, %v501, 0
        %580 = vmatprep.subr.mxu0 0.0
        %581 = vmatpush1.msra.mxu0 0.0
        %582 = vmatprep.subr.mxu0 0.0
        %583 = vmatpush1.msra.mxu0 0.0
        %584 = vmatprep.subr.mxu0 0.0
        %585 = vmatpush1.msra.mxu0 0.0
        %586 = vmatprep.subr.mxu0 0.0
        %587 = vmatpush1.msra.mxu0 0.0
        %588 = vmatprep.subr.mxu0 0.0
        %589 = vmatpush1.msra.mxu0 0.0
        %590 = vmatprep.subr.mxu0 0.0
        %591 = vmatpush1.msra.mxu0 0.0
        %592 = vmatprep.subr.mxu0 0.0
        %593 = vmatpush1.msra.mxu0 0.0
        %594 = vmatprep.subr.mxu0 0.0
        %595 = vmatpush1.msra.mxu0 0.0
        %596 = vmatprep.subr.mxu0 0.0
        %597 = vmatpush1.msra.mxu0 0.0
        %598 = vmatprep.subr.mxu0 0.0
        %599 = vmatpush1.msra.mxu0 0.0
        %600 = vmatprep.subr.mxu0 0.0
        %601 = vmatpush1.msra.mxu0 0.0
        %602 = vmatprep.subr.mxu0 0.0
        %603 = vmatpush1.msra.mxu0 0.0
        %604 = vmatprep.subr.mxu0 0.0
        %605 = vmatpush1.msra.mxu0 0.0
        %606 = vmatprep.subr.mxu0 0.0
        %607 = vmatpush1.msra.mxu0 0.0
        %608 = vmatprep.subr.mxu0 0.0
        %609 = vmatpush1.msra.mxu0 %v464
        %610 = vmatprep.subr.mxu0 0.0
        %611 = vmatpush1.msra.mxu0 %v463
        %612 = vmatprep.subr.mxu0 0.0
        %613 = vmatpush2.msra.mxu0 0.0
        %614 = vmatprep.subr.mxu0 0.0
        %615 = vmatpush2.msra.mxu0 0.0
        %616 = vmatprep.subr.mxu0 0.0
        %617 = vmatpush2.msra.mxu0 0.0
        %618 = vmatprep.subr.mxu0 0.0
        %619 = vmatpush2.msra.mxu0 0.0
        %620 = vmatprep.subr.mxu0 0.0
        %621 = vmatpush2.msra.mxu0 0.0
        %622 = vmatprep.subr.mxu0 0.0
        %623 = vmatpush2.msra.mxu0 0.0
        %624 = vmatprep.subr.mxu0 0.0
        %625 = vmatpush2.msra.mxu0 0.0
        %626 = vmatprep.subr.mxu0 0.0
        %627 = vmatpush2.msra.mxu0 0.0
        %628 = vmatprep.subr.mxu0 0.0
        %629 = vmatpush2.msra.mxu0 0.0
        %630 = vmatprep.subr.mxu0 0.0
        %631 = vmatpush2.msra.mxu0 0.0
        %632 = vmatprep.subr.mxu0 0.0
        %633 = vmatpush2.msra.mxu0 0.0
        %634 = vmatprep.subr.mxu0 0.0
        %635 = vmatpush2.msra.mxu0 0.0
        %636 = vmatprep.subr.mxu0 0.0
        %637 = vmatpush2.msra.mxu0 0.0
        %638 = vmatprep.subr.mxu0 0.0
        %639 = vmatpush2.msra.mxu0 0.0
        %640 = vmatprep.subr.mxu0 0.0
        %641 = vmatpush2.msra.mxu0 0.0
        %642 = vmatprep.subr.mxu0 0.0
        %643 = vmatpush2.msra.mxu0 0.0
        %644 = vmatprep.mubr.f32.mxu0 0.0
        %645 = vmatmul.mubr.f32.gmra.mxu0 %v578
        %v646 = vpop.f32.mrf.mxu0
        %v647 = vadd.f32 %v574, %v646
        %v648 = vpop.f32.mrf.mxu0
        %649 = vdwg.mxu0
        %v650 = vld [vmem:[%s4] sm:$0x3]
        %v651 = vadd.f32 %v647, %v650
        %v652 = vmax.f32 %v651, 0.0
        %v653 = vld [vmem:[%s5] sm:$0xff]
        %v654 = vld [vmem:[%s5 + $0x8] sm:$0xff]
        %v655 = vld [vmem:[%s6] sm:$0xff]
        %v656 = vld [vmem:[%s6 + $0x8] sm:$0xff]
        %vm657 = vcmask 15360
        %v659 = vsel %vm657, %v653, 0
        %v662 = vsel %vm657, %v654, 0
        %vm664 = vcmask 1041408
        %v666 = vsel %vm664, %v652, 0
        %668 = vmatprep.subr.mxu0 0.0
        %669 = vmatpush1.msra.mxu0 0.0
        %670 = vmatprep.subr.mxu0 0.0
        %671 = vmatpush1.msra.mxu0 0.0
        %672 = vmatprep.subr.mxu0 0.0
        %673 = vmatpush1.msra.mxu0 0.0
        %674 = vmatprep.subr.mxu0 0.0
        %675 = vmatpush1.msra.mxu0 0.0
        %676 = vmatprep.subr.mxu0 0.0
        %677 = vmatpush1.msra.mxu0 0.0
        %678 = vmatprep.subr.mxu0 0.0
        %679 = vmatpush1.msra.mxu0 0.0
        %680 = vmatprep.subr.mxu0 0.0
        %681 = vmatpush1.msra.mxu0 0.0
        %682 = vmatprep.subr.mxu0 0.0
        %683 = vmatpush1.msra.mxu0 0.0
        %684 = vmatprep.subr.mxu0 0.0
        %685 = vmatpush1.msra.mxu0 0.0
        %686 = vmatprep.subr.mxu0 0.0
        %687 = vmatpush1.msra.mxu0 0.0
        %688 = vmatprep.subr.mxu0 0.0
        %689 = vmatpush1.msra.mxu0 0.0
        %690 = vmatprep.subr.mxu0 0.0
        %691 = vmatpush1.msra.mxu0 0.0
        %692 = vmatprep.subr.mxu0 0.0
        %693 = vmatpush1.msra.mxu0 0.0
        %694 = vmatprep.subr.mxu0 0.0
        %695 = vmatpush1.msra.mxu0 0.0
        %696 = vmatprep.subr.mxu0 0.0
        %697 = vmatpush1.msra.mxu0 0.0
        %698 = vmatprep.subr.mxu0 0.0
        %699 = vmatpush1.msra.mxu0 %v666
        %700 = vmatprep.subr.mxu0 0.0
        %701 = vmatpush2.msra.mxu0 0.0
        %702 = vmatprep.subr.mxu0 0.0
        %703 = vmatpush2.msra.mxu0 0.0
        %704 = vmatprep.subr.mxu0 0.0
        %705 = vmatpush2.msra.mxu0 0.0
        %706 = vmatprep.subr.mxu0 0.0
        %707 = vmatpush2.msra.mxu0 0.0
        %708 = vmatprep.subr.mxu0 0.0
        %709 = vmatpush2.msra.mxu0 0.0
        %710 = vmatprep.subr.mxu0 0.0
        %711 = vmatpush2.msra.mxu0 0.0
        %712 = vmatprep.subr.mxu0 0.0
        %713 = vmatpush2.msra.mxu0 0.0
        %714 = vmatprep.subr.mxu0 0.0
        %715 = vmatpush2.msra.mxu0 0.0
        %716 = vmatprep.subr.mxu0 0.0
        %717 = vmatpush2.msra.mxu0 0.0
        %718 = vmatprep.subr.mxu0 0.0
        %719 = vmatpush2.msra.mxu0 0.0
        %720 = vmatprep.subr.mxu0 0.0
        %721 = vmatpush2.msra.mxu0 0.0
        %722 = vmatprep.subr.mxu0 0.0
        %723 = vmatpush2.msra.mxu0 0.0
        %724 = vmatprep.subr.mxu0 0.0
        %725 = vmatpush2.msra.mxu0 0.0
        %726 = vmatprep.subr.mxu0 0.0
        %727 = vmatpush2.msra.mxu0 0.0
        %728 = vmatprep.subr.mxu0 0.0
        %729 = vmatpush2.msra.mxu0 0.0
        %730 = vmatprep.subr.mxu0 0.0
        %731 = vmatpush2.msra.mxu0 0.0
        %732 = vmatprep.mubr.f32.mxu0 0.0
        %733 = vmatmul.mubr.f32.gmra.mxu0 %v659
        %v734 = vpop.f32.mrf.mxu0
        %v735 = vadd.f32 %v655, %v734
        %v736 = vpop.f32.mrf.mxu0
        %737 = vmatprep.mubr.f32.mxu0 0.0
        %738 = vmatmul.mubr.f32.gmra.mxu0 %v662
        %v739 = vpop.f32.mrf.mxu0
        %v740 = vadd.f32 %v656, %v739
        %v741 = vpop.f32.mrf.mxu0
        %742 = vdwg.mxu0
        %v743 = vxor.u32 %v735, 2147483648
        %v744 = vxor.u32 %v740, 2147483648
        %v745 = vmul.f32 %v743, 1.442695
        %v746 = vpow.pop %v745
        %v747 = vmul.f32 %v744, 1.442695
        %v748 = vpow.pop %v747
        %v749 = vadd.f32 %v746, 1.0
        %v750 = vadd.f32 %v748, 1.0
        %v751 = vrcp.pop %v749
        %v752 = vmul.f32 1.0, %v751
        %v753 = vrcp.pop %v750
        %v754 = vmul.f32 1.0, %v753
        %v755 = vld [vmem:[%s7] sm:$0xff]
        %v756 = vld [vmem:[%s7 + $0x8] sm:$0xff]
        %v757 = vld [vmem:[%s8] sm:$0xff]
        %v758 = vld [vmem:[%s8 + $0x8] sm:$0xff]
        %v760 = vsel %vm657, %v755, 0
        %v763 = vsel %vm657, %v756, 0
        %765 = vmatprep.subr.mxu0 0.0
        %766 = vmatpush1.msra.mxu0 0.0
        %767 = vmatprep.subr.mxu0 0.0
        %768 = vmatpush1.msra.mxu0 0.0
        %769 = vmatprep.subr.mxu0 0.0
        %770 = vmatpush1.msra.mxu0 0.0
        %771 = vmatprep.subr.mxu0 0.0
        %772 = vmatpush1.msra.mxu0 0.0
        %773 = vmatprep.subr.mxu0 0.0
        %774 = vmatpush1.msra.mxu0 0.0
        %775 = vmatprep.subr.mxu0 0.0
        %776 = vmatpush1.msra.mxu0 0.0
        %777 = vmatprep.subr.mxu0 0.0
        %778 = vmatpush1.msra.mxu0 0.0
        %779 = vmatprep.subr.mxu0 0.0
        %780 = vmatpush1.msra.mxu0 0.0
        %781 = vmatprep.subr.mxu0 0.0
        %782 = vmatpush1.msra.mxu0 0.0
        %783 = vmatprep.subr.mxu0 0.0
        %784 = vmatpush1.msra.mxu0 0.0
        %785 = vmatprep.subr.mxu0 0.0
        %786 = vmatpush1.msra.mxu0 0.0
        %787 = vmatprep.subr.mxu0 0.0
        %788 = vmatpush1.msra.mxu0 0.0
        %789 = vmatprep.subr.mxu0 0.0
        %790 = vmatpush1.msra.mxu0 0.0
        %791 = vmatprep.subr.mxu0 0.0
        %792 = vmatpush1.msra.mxu0 0.0
        %793 = vmatprep.subr.mxu0 0.0
        %794 = vmatpush1.msra.mxu0 0.0
        %795 = vmatprep.subr.mxu0 0.0
        %796 = vmatpush1.msra.mxu0 %v666
        %797 = vmatprep.subr.mxu0 0.0
        %798 = vmatpush2.msra.mxu0 0.0
        %799 = vmatprep.subr.mxu0 0.0
        %800 = vmatpush2.msra.mxu0 0.0
        %801 = vmatprep.subr.mxu0 0.0
        %802 = vmatpush2.msra.mxu0 0.0
        %803 = vmatprep.subr.mxu0 0.0
        %804 = vmatpush2.msra.mxu0 0.0
        %805 = vmatprep.subr.mxu0 0.0
        %806 = vmatpush2.msra.mxu0 0.0
        %807 = vmatprep.subr.mxu0 0.0
        %808 = vmatpush2.msra.mxu0 0.0
        %809 = vmatprep.subr.mxu0 0.0
        %810 = vmatpush2.msra.mxu0 0.0
        %811 = vmatprep.subr.mxu0 0.0
        %812 = vmatpush2.msra.mxu0 0.0
        %813 = vmatprep.subr.mxu0 0.0
        %814 = vmatpush2.msra.mxu0 0.0
        %815 = vmatprep.subr.mxu0 0.0
        %816 = vmatpush2.msra.mxu0 0.0
        %817 = vmatprep.subr.mxu0 0.0
        %818 = vmatpush2.msra.mxu0 0.0
        %819 = vmatprep.subr.mxu0 0.0
        %820 = vmatpush2.msra.mxu0 0.0
        %821 = vmatprep.subr.mxu0 0.0
        %822 = vmatpush2.msra.mxu0 0.0
        %823 = vmatprep.subr.mxu0 0.0
        %824 = vmatpush2.msra.mxu0 0.0
        %825 = vmatprep.subr.mxu0 0.0
        %826 = vmatpush2.msra.mxu0 0.0
        %827 = vmatprep.subr.mxu0 0.0
        %828 = vmatpush2.msra.mxu0 0.0
        %829 = vmatprep.mubr.f32.mxu0 0.0
        %830 = vmatmul.mubr.f32.gmra.mxu0 %v760
        %v831 = vpop.f32.mrf.mxu0
        %v832 = vadd.f32 %v757, %v831
        %v833 = vpop.f32.mrf.mxu0
        %834 = vmatprep.mubr.f32.mxu0 0.0
        %835 = vmatmul.mubr.f32.gmra.mxu0 %v763
        %v836 = vpop.f32.mrf.mxu0
        %v837 = vadd.f32 %v758, %v836
        %v838 = vpop.f32.mrf.mxu0
        %839 = vdwg.mxu0
        %v840 = vxor.u32 %v832, 2147483648
        %v841 = vxor.u32 %v837, 2147483648
        %v842 = vmul.f32 %v840, 1.442695
        %v843 = vpow.pop %v842
        %v844 = vmul.f32 %v841, 1.442695
        %v845 = vpow.pop %v844
        %v846 = vadd.f32 %v843, 1.0
        %v847 = vadd.f32 %v845, 1.0
        %v848 = vrcp.pop %v846
        %v849 = vmul.f32 1.0, %v848
        %v850 = vrcp.pop %v847
        %v851 = vmul.f32 1.0, %v850
        %853 = vset.pattern.permute.xlu0 0
        %854 = vperm.xlu0 %853, %v752
        %v855 = vpop.permute.xlu0 %854
        %858 = vset.pattern.permute.xlu0 0
        %859 = vperm.xlu0 %858, %v754
        %v860 = vpop.permute.xlu0 %859
        %v862 = vmul.f32 %v429, %v855
        %v863 = vmul.f32 %v430, %v855
        %v864 = vmul.f32 %v431, %v855
        %v865 = vmul.f32 %v432, %v855
        %v866 = vmul.f32 %v433, %v855
        %v867 = vmul.f32 %v434, %v855
        %v868 = vmul.f32 %v435, %v855
        %v869 = vmul.f32 %v436, %v855
        %v870 = vmul.f32 %v437, %v860
        %v871 = vmul.f32 %v438, %v860
        %v872 = vmul.f32 %v439, %v860
        %v873 = vmul.f32 %v440, %v860
        %v874 = vmul.f32 %v441, %v860
        %v875 = vmul.f32 %v442, %v860
        %v876 = vmul.f32 %v443, %v860
        %v877 = vmul.f32 %v444, %v860
        %878 = vst [vmem:[%s421] sm:$0xff] %v862
        %879 = vst [vmem:[%s421 + $0x8] sm:$0xff] %v863
        %880 = vst [vmem:[%s421 + $0x10] sm:$0xff] %v864
        %881 = vst [vmem:[%s421 + $0x18] sm:$0xff] %v865
        %882 = vst [vmem:[%s421 + $0x20] sm:$0xff] %v866
        %883 = vst [vmem:[%s421 + $0x28] sm:$0xff] %v867
        %884 = vst [vmem:[%s421 + $0x30] sm:$0xff] %v868
        %885 = vst [vmem:[%s421 + $0x38] sm:$0xff] %v869
        %886 = vst [vmem:[%s421 + $0x40] sm:$0xff] %v870
        %887 = vst [vmem:[%s421 + $0x48] sm:$0xff] %v871
        %888 = vst [vmem:[%s421 + $0x50] sm:$0xff] %v872
        %889 = vst [vmem:[%s421 + $0x58] sm:$0xff] %v873
        %890 = vst [vmem:[%s421 + $0x60] sm:$0xff] %v874
        %891 = vst [vmem:[%s421 + $0x68] sm:$0xff] %v875
        %892 = vst [vmem:[%s421 + $0x70] sm:$0xff] %v876
        %893 = vst [vmem:[%s421 + $0x78] sm:$0xff] %v877
        %v894 = vld [vmem:[%s382] sm:$0xff]
        %v895 = vld [vmem:[%s382 + $0x8] sm:$0xff]
        %v896 = vld [vmem:[%s382 + $0x10] sm:$0xff]
        %v897 = vld [vmem:[%s382 + $0x18] sm:$0xff]
        %v898 = vld [vmem:[%s382 + $0x20] sm:$0xff]
        %v899 = vld [vmem:[%s382 + $0x28] sm:$0xff]
        %v900 = vld [vmem:[%s382 + $0x30] sm:$0xff]
        %v901 = vld [vmem:[%s382 + $0x38] sm:$0xff]
        %v902 = vld [vmem:[%s382 + $0x40] sm:$0xff]
        %v903 = vld [vmem:[%s382 + $0x48] sm:$0xff]
        %v904 = vld [vmem:[%s382 + $0x50] sm:$0xff]
        %v905 = vld [vmem:[%s382 + $0x58] sm:$0xff]
        %v906 = vld [vmem:[%s382 + $0x60] sm:$0xff]
        %v907 = vld [vmem:[%s382 + $0x68] sm:$0xff]
        %v908 = vld [vmem:[%s382 + $0x70] sm:$0xff]
        %v909 = vld [vmem:[%s382 + $0x78] sm:$0xff]
        %911 = vset.pattern.permute.xlu0 0
        %912 = vperm.xlu0 %911, %v849
        %v913 = vpop.permute.xlu0 %912
        %916 = vset.pattern.permute.xlu0 0
        %917 = vperm.xlu0 %916, %v851
        %v918 = vpop.permute.xlu0 %917
        %v920 = vmul.f32 %v894, %v913
        %v921 = vmul.f32 %v895, %v913
        %v922 = vmul.f32 %v896, %v913
        %v923 = vmul.f32 %v897, %v913
        %v924 = vmul.f32 %v898, %v913
        %v925 = vmul.f32 %v899, %v913
        %v926 = vmul.f32 %v900, %v913
        %v927 = vmul.f32 %v901, %v913
        %v928 = vmul.f32 %v902, %v918
        %v929 = vmul.f32 %v903, %v918
        %v930 = vmul.f32 %v904, %v918
        %v931 = vmul.f32 %v905, %v918
        %v932 = vmul.f32 %v906, %v918
        %v933 = vmul.f32 %v907, %v918
        %v934 = vmul.f32 %v908, %v918
        %v935 = vmul.f32 %v909, %v918
        %936 = vst [vmem:[%s428] sm:$0xff] %v920
        %937 = vst [vmem:[%s428 + $0x8] sm:$0xff] %v921
        %938 = vst [vmem:[%s428 + $0x10] sm:$0xff] %v922
        %939 = vst [vmem:[%s428 + $0x18] sm:$0xff] %v923
        %940 = vst [vmem:[%s428 + $0x20] sm:$0xff] %v924
        %941 = vst [vmem:[%s428 + $0x28] sm:$0xff] %v925
        %942 = vst [vmem:[%s428 + $0x30] sm:$0xff] %v926
        %943 = vst [vmem:[%s428 + $0x38] sm:$0xff] %v927
        %944 = vst [vmem:[%s428 + $0x40] sm:$0xff] %v928
        %945 = vst [vmem:[%s428 + $0x48] sm:$0xff] %v929
        %946 = vst [vmem:[%s428 + $0x50] sm:$0xff] %v930
        %947 = vst [vmem:[%s428 + $0x58] sm:$0xff] %v931
        %948 = vst [vmem:[%s428 + $0x60] sm:$0xff] %v932
        %949 = vst [vmem:[%s428 + $0x68] sm:$0xff] %v933
        %950 = vst [vmem:[%s428 + $0x70] sm:$0xff] %v934
        %951 = vst [vmem:[%s428 + $0x78] sm:$0xff] %v935
        %s952 = sand.u32 %s241, 1
        %s953 = scalar_lea.sflag [#allocation4], %s952
        %s954 = sand.u32 %s241, 1
        %s955 = smul.addr %s954, 128
        %s956 = scalar_lea.vmem [#allocation7], %s955
        %s957 = sand.u32 %s267, 1
        %s958 = scalar_lea.sflag [#allocation9], %s957
        %s959 = sand.u32 %s267, 1
        %s960 = smul.addr %s959, 128
        %s961 = scalar_lea.vmem [#allocation8], %s960
        // Predicated region
        $region65: #{tpu_custom_call.1} parent=55 // pred_check
          %p962 = pneg %p251
        $region66: #{tpu_custom_call.1} parent=55 // pred_check_branch
          %964 = sbr.rel (%p962) target = $region68
        $region67: #{tpu_custom_call.1} parent=55 // pred_region
          %s966 = ssub.s32 2048, 2048
          %967 = vsyncadd %s953, %s966
          %s968 = smul.addr %s34, 16
          %s969 = smul.addr %s968, 128
          %s970 = scalar_lea.hbm %s9, %s969
          %s971 = sshll.u32 %s956, 4
          %s972 = int_to_ptr.vmem [resolvable:$true] %s971
          %977 = dma.vmem_to_hbm [thread:$0]  %s972, 2048, %s970, %s953, 1024, 1024, 64
        $region68: #{tpu_custom_call.1} parent=55 // pred_fallthru
          _
        // Predicated region
        $region69: #{tpu_custom_call.1} parent=55 // pred_check
          %p978 = pneg %p277
        $region70: #{tpu_custom_call.1} parent=55 // pred_check_branch
          %980 = sbr.rel (%p978) target = $region72
        $region71: #{tpu_custom_call.1} parent=55 // pred_region
          %s982 = ssub.s32 2048, 2048
          %983 = vsyncadd %s958, %s982
          %s984 = smul.addr %s34, 16
          %s985 = smul.addr %s984, 128
          %s986 = scalar_lea.hbm %s10, %s985
          %s987 = sshll.u32 %s961, 4
          %s988 = int_to_ptr.vmem [resolvable:$true] %s987
          %993 = dma.vmem_to_hbm [thread:$0]  %s988, 2048, %s986, %s958, 1024, 1024, 64
        $region72: #{tpu_custom_call.1} parent=55 // pred_fallthru
          _
      $region56: #{tpu_custom_call.1} parent=5 // pred_fallthru
        _
      %p994 = scmp.le.s32.totalorder 2, %s29
      // Predicated region
      $region73: #{tpu_custom_call.1} parent=5 // pred_check
        %p995 = pneg %p994
      $region74: #{tpu_custom_call.1} parent=5 // pred_check_branch
        %997 = sbr.rel (%p995) target = $region76
      $region75: #{tpu_custom_call.1} parent=5 // pred_region
        %s998 = ssub.s32 %s29, 2
        // Predicated region
        $region77: #{tpu_custom_call.1} parent=75 // pred_check
          %p999 = pneg %p257
        $region78: #{tpu_custom_call.1} parent=75 // pred_check_branch
          %1001 = sbr.rel (%p999) target = $region80
        $region79: #{tpu_custom_call.1} parent=75 // pred_region
          %s1002 = sand.u32 %s242, 1
          %s1003 = scalar_lea.sflag [#allocation4], %s1002
          %s1004 = sand.u32 %s242, 1
          %s1005 = smul.addr %s1004, 128
          %s1006 = scalar_lea.vmem [#allocation7], %s1005
          %1007 = dma.done %s1003, 2048
        $region80: #{tpu_custom_call.1} parent=75 // pred_fallthru
          _
        // Predicated region
        $region81: #{tpu_custom_call.1} parent=75 // pred_check
          %p1008 = pneg %p283
        $region82: #{tpu_custom_call.1} parent=75 // pred_check_branch
          %1010 = sbr.rel (%p1008) target = $region84
        $region83: #{tpu_custom_call.1} parent=75 // pred_region
          %s1011 = sand.u32 %s268, 1
          %s1012 = scalar_lea.sflag [#allocation9], %s1011
          %s1013 = sand.u32 %s268, 1
          %s1014 = smul.addr %s1013, 128
          %s1015 = scalar_lea.vmem [#allocation8], %s1014
          %1016 = dma.done %s1012, 2048
        $region84: #{tpu_custom_call.1} parent=75 // pred_fallthru
          _
      $region76: #{tpu_custom_call.1} parent=5 // pred_fallthru
        _
    $region6: #{tpu_custom_call.1} parent=1 // loop_footer
      %s33 = sadd.s32 1, %s29
    $region7: #{tpu_custom_call.1} parent=1 // loop_footer_branch
      %28 = sbr.rel target = $region3
    $region8: #{tpu_custom_call.1} parent=1 // loop_exit
      _
    %1017 = vsyncpa [#allocation3], 1
    %s1018 = scalar_lea.sflag [#allocation3], 1
    %1019 = vsyncpa %s1018, 1
    %1020 = vsyncpa [#allocation6], 1
    %s1021 = scalar_lea.sflag [#allocation6], 1
    %1022 = vsyncpa %s1021, 1
    %1023 = vsyncpa [#allocation4], 1
    %s1024 = scalar_lea.sflag [#allocation4], 1
    %1025 = vsyncpa %s1024, 1
    %1026 = vsyncpa [#allocation9], 1
    %s1027 = scalar_lea.sflag [#allocation9], 1
    %1028 = vsyncpa %s1027, 1

</llo_original>
